<compile_context>
chip_gen: v7x
topology: tpu7x:2x2x1
jax: 0.10.0
libtpu: 0.0.40
codegen_flags: <defaults>
</compile_context>

<pallas_src>
import functools

import jax
import jax.numpy as jnp
from jax import lax
from jax.experimental import pallas as pl
from jax.experimental.pallas import tpu as pltpu


def _round_up(x: int, m: int) -> int:
    return ((x + m - 1) // m) * m


def _pad2d(x: jax.Array, rows: int, cols: int) -> jax.Array:
    r, c = x.shape
    if r == rows and c == cols:
        return x
    return jnp.pad(x, ((0, rows - r), (0, cols - c)))


_BATCH_CONTRACT = (((0,), (0,)), ((), ()))  # contract over axis 0 of both operands


def _coral_kernel(src_ref, tgt_ref, out_ref, acc_ref, ssum_ref, tsum_ref, *,
                  b_s: int, b_t: int, d: int, normalize: bool):
    i = pl.program_id(0)

    @pl.when(i == 0)
    def _init():
        acc_ref[...] = jnp.zeros_like(acc_ref)
        ssum_ref[...] = jnp.zeros_like(ssum_ref)
        tsum_ref[...] = jnp.zeros_like(tsum_ref)

    s = src_ref[...].astype(jnp.float32)   # (TB, d_pad), padded rows are zero
    t = tgt_ref[...].astype(jnp.float32)   # (TB, d_pad)

    # Column sums for the mean correction (zero padding contributes nothing).
    # XLU reduction overlaps with the MXU matmuls below.
    ssum_ref[...] += jnp.sum(s, axis=0, keepdims=True)
    tsum_ref[...] += jnp.sum(t, axis=0, keepdims=True)

    # Signed/scaled Gram accumulation (no transpose materialized, no concat
    # copies -- just two batch-contracted MXU matmuls and d^2 VPU ops):
    #   acc += S^T S / (b_s - 1)  -  T^T T / (b_t - 1)
    c_s = 1.0 / float(b_s - 1)
    c_t = 1.0 / float(b_t - 1)
    g_s = lax.dot_general(s, s, dimension_numbers=_BATCH_CONTRACT,
                          preferred_element_type=jnp.float32)
    g_t = lax.dot_general(t, t, dimension_numbers=_BATCH_CONTRACT,
                          preferred_element_type=jnp.float32)
    acc_ref[...] += g_s * c_s - g_t * c_t

    @pl.when(i == pl.num_programs(0) - 1)
    def _finalize():
        ssum = ssum_ref[...]   # (1, d_pad)
        tsum = tsum_ref[...]   # (1, d_pad)
        # cov = (G - b*mu*mu^T)/(b-1), mu = sum/b  =>  G/(b-1) - sum sum^T/(b(b-1))
        corr_s = lax.dot_general(
            ssum, ssum, dimension_numbers=_BATCH_CONTRACT,
            preferred_element_type=jnp.float32) * (1.0 / (b_s * (b_s - 1)))
        corr_t = lax.dot_general(
            tsum, tsum, dimension_numbers=_BATCH_CONTRACT,
            preferred_element_type=jnp.float32) * (1.0 / (b_t * (b_t - 1)))
        diff = acc_ref[...] - corr_s + corr_t
        loss = jnp.sum(diff * diff, keepdims=True)   # (1, 1) Frobenius^2
        if normalize:
            loss = loss * (1.0 / (4.0 * d * d))
        out_ref[...] = loss


def _pick_batch_tile(b_s: int, b_t: int, d_pad: int, block_batch: int) -> int:
    # Keep the double-buffered input tiles (2 inputs x 2 buffers x f32) within
    # ~24 MiB of scoped VMEM, leaving room for the (d_pad, d_pad) accumulator.
    budget = 24 << 20
    max_tb = max(8, (budget // (16 * d_pad)) // 8 * 8)
    tb = min(block_batch, max_tb, _round_up(max(b_s, b_t), 8))
    return max(8, _round_up(tb, 8))


def coral_loss(source: jax.Array, target: jax.Array, normalize: bool = True,
               block_batch: int = 512) -> jax.Array:
    """CORAL loss. source: (b_s, d), target: (b_t, d). Returns scalar f32."""
    assert source.ndim == 2 and target.ndim == 2
    assert source.shape[1] == target.shape[1]
    b_s, d = source.shape
    b_t, _ = target.shape
    assert b_s >= 2 and b_t >= 2, "CORAL requires at least 2 samples per domain"

    # Lane-align the feature dim and sublane-align the batch tile; zero padding
    # is exact under the Gram formulation used by the kernel.
    d_pad = _round_up(d, 128)
    tb = _pick_batch_tile(b_s, b_t, d_pad, block_batch)
    n_tiles = max(pl.cdiv(b_s, tb), pl.cdiv(b_t, tb))
    rows = n_tiles * tb

    src_p = _pad2d(source, rows, d_pad)
    tgt_p = _pad2d(target, rows, d_pad)

    kernel = functools.partial(
        _coral_kernel, b_s=b_s, b_t=b_t, d=d, normalize=normalize)

    # Scoped-VMEM budget from the actual block footprint: double-buffered input
    # tiles, the (d_pad, d_pad) accumulator + finalize temporaries, column sums.
    tile_bytes = tb * d_pad * 4
    acc_bytes = d_pad * d_pad * 4
    est = 2 * 2 * tile_bytes + 4 * tile_bytes + 4 * acc_bytes + 8 * d_pad * 4 + (2 << 20)
    vmem_limit = int(min(max(est, 16 << 20), 56 << 20))
    # TODO(synk): for very large d (>= ~2048 on v7x) additionally tile the (d, d)
    # accumulator into output blocks with parallel grid axes for the 2 TCs.

    out = pl.pallas_call(
        kernel,
        out_shape=jax.ShapeDtypeStruct((1, 1), jnp.float32),
        grid_spec=pltpu.PrefetchScalarGridSpec(
            num_scalar_prefetch=0,
            grid=(n_tiles,),
            in_specs=[
                pl.BlockSpec((tb, d_pad), lambda i: (i, 0)),
                pl.BlockSpec((tb, d_pad), lambda i: (i, 0)),
            ],
            out_specs=pl.BlockSpec((1, 1), lambda i: (0, 0)),
            scratch_shapes=[
                pltpu.VMEM((d_pad, d_pad), jnp.float32),  # signed Gram accumulator
                pltpu.VMEM((1, d_pad), jnp.float32),      # source column sums
                pltpu.VMEM((1, d_pad), jnp.float32),      # target column sums
            ],
        ),
        compiler_params=pltpu.CompilerParams(
            dimension_semantics=("arbitrary",),   # batch axis is a reduction
            vmem_limit_bytes=vmem_limit,
        ),
    )(src_p, tgt_p)
    return out[0, 0]


def coral_ref(source, target, normalize=True):
    """Pure-JAX reference mirroring the PyTorch forward."""
    b_s, d = source.shape
    b_t, _ = target.shape
    s_c = source - source.mean(axis=0, keepdims=True)
    t_c = target - target.mean(axis=0, keepdims=True)
    cov_s = s_c.T @ s_c / (b_s - 1)
    cov_t = t_c.T @ t_c / (b_t - 1)
    diff = cov_s - cov_t
    loss = jnp.sum(diff * diff)
    if normalize:
        loss = loss / (4 * d * d)
    return loss


if __name__ == "__main__":
    key = jax.random.PRNGKey(0)
    k_s, k_t, k_s2, k_t2 = jax.random.split(key, 4)

    # Small shapes consistent with the module: (batch, feature_dim).
    b_s, b_t, d = 8, 8, 32
    source = jax.random.normal(k_s, (b_s, d), dtype=jnp.float32)
    target = 0.5 * jax.random.normal(k_t, (b_t, d), dtype=jnp.float32) + 0.1

    loss = coral_loss(source, target, normalize=True)
    jax.block_until_ready(loss)
    ref = coral_ref(source, target, normalize=True)
    assert jnp.allclose(loss, ref, rtol=1e-4, atol=1e-6), (loss, ref)

    # Second case: unequal batch sizes, non-aligned d, normalize=False
    # (exercises padding and the raw Frobenius path).
    source2 = jax.random.normal(k_s2, (12, 48), dtype=jnp.float32)
    target2 = 0.7 * jax.random.normal(k_t2, (20, 48), dtype=jnp.float32) - 0.2
    loss2 = coral_loss(source2, target2, normalize=False)
    jax.block_until_ready(loss2)
    ref2 = coral_ref(source2, target2, normalize=False)
    assert jnp.allclose(loss2, ref2, rtol=1e-4, atol=1e-5), (loss2, ref2)

    print("KERNEL_OK")
</pallas_src>

<mosaic_0001>
module attributes {stable_mosaic.version = 11 : i64} {
  func.func @_coral_kernel(%arg0: i32, %arg1: memref<8x128xf32, #tpu.memory_space<vmem>>, %arg2: memref<8x128xf32, #tpu.memory_space<vmem>>, %arg3: memref<1x1xf32, #tpu.memory_space<vmem>>, %arg4: memref<128x128xf32, #tpu.memory_space<vmem>>, %arg5: memref<1x128xf32, #tpu.memory_space<vmem>>, %arg6: memref<1x128xf32, #tpu.memory_space<vmem>>) attributes {dimension_semantics = [#tpu.dimension_semantics<arbitrary>], iteration_bounds = array<i64: 1>, scalar_prefetch = 0 : i64, scratch_operands = 3 : i64, tpu.core_type = #tpu.core_type<tc>, window_params = [{transform_indices = @transform_0, window_bounds = array<i64: 8, 128>}, {transform_indices = @transform_1, window_bounds = array<i64: 8, 128>}, {pipeline_mode = #tpu.pipeline_mode<synchronous>, transform_indices = @transform_2, window_bounds = array<i64: 1, 1>}]} {
    %c0_i32 = arith.constant 0 : i32
    %0 = arith.cmpi eq, %arg0, %c0_i32 : i32
    %1 = arith.extui %0 : i1 to i32
    %c0_i32_0 = arith.constant 0 : i32
    %2 = arith.cmpi ne, %1, %c0_i32_0 : i32
    scf.if %2 {
      %cst_23 = arith.constant 0.000000e+00 : f32
      %28 = vector.broadcast %cst_23 : f32 to vector<128x128xf32>
      %c0_24 = arith.constant 0 : index
      %c0_25 = arith.constant 0 : index
      %29 = vector.load %arg4[%c0_24, %c0_25] : memref<128x128xf32, #tpu.memory_space<vmem>>, vector<128x128xf32>
      tpu.vector_store %arg4[%c0_24, %c0_25], %28 {strides = array<i32>} : memref<128x128xf32, #tpu.memory_space<vmem>>, vector<128x128xf32>,
      %cst_26 = arith.constant 0.000000e+00 : f32
      %30 = vector.broadcast %cst_26 : f32 to vector<1x128xf32>
      %c0_27 = arith.constant 0 : index
      %c0_28 = arith.constant 0 : index
      %31 = vector.load %arg5[%c0_27, %c0_28] : memref<1x128xf32, #tpu.memory_space<vmem>>, vector<1x128xf32>
      tpu.vector_store %arg5[%c0_27, %c0_28], %30 {strides = array<i32>} : memref<1x128xf32, #tpu.memory_space<vmem>>, vector<1x128xf32>,
      %cst_29 = arith.constant 0.000000e+00 : f32
      %32 = vector.broadcast %cst_29 : f32 to vector<1x128xf32>
      %c0_30 = arith.constant 0 : index
      %c0_31 = arith.constant 0 : index
      %33 = vector.load %arg6[%c0_30, %c0_31] : memref<1x128xf32, #tpu.memory_space<vmem>>, vector<1x128xf32>
      tpu.vector_store %arg6[%c0_30, %c0_31], %32 {strides = array<i32>} : memref<1x128xf32, #tpu.memory_space<vmem>>, vector<1x128xf32>,
    } else {
    }
    %c0 = arith.constant 0 : index
    %c0_1 = arith.constant 0 : index
    %3 = vector.load %arg1[%c0, %c0_1] : memref<8x128xf32, #tpu.memory_space<vmem>>, vector<8x128xf32>
    %c0_2 = arith.constant 0 : index
    %c0_3 = arith.constant 0 : index
    %4 = vector.load %arg2[%c0_2, %c0_3] : memref<8x128xf32, #tpu.memory_space<vmem>>, vector<8x128xf32>
    %c0_4 = arith.constant 0 : index
    %c0_5 = arith.constant 0 : index
    %5 = vector.load %arg5[%c0_4, %c0_5] : memref<1x128xf32, #tpu.memory_space<vmem>>, vector<1x128xf32>
    %cst = arith.constant dense<0.000000e+00> : vector<128xf32>
    %6 = vector.multi_reduction <add>, %3, %cst [0] : vector<8x128xf32> to vector<128xf32>
    %7 = vector.shape_cast %6 : vector<128xf32> to vector<1x128xf32>
    %8 = arith.addf %5, %7 : vector<1x128xf32>
    %c0_6 = arith.constant 0 : index
    %c0_7 = arith.constant 0 : index
    %9 = vector.load %arg5[%c0_6, %c0_7] : memref<1x128xf32, #tpu.memory_space<vmem>>, vector<1x128xf32>
    tpu.vector_store %arg5[%c0_6, %c0_7], %8 {strides = array<i32>} : memref<1x128xf32, #tpu.memory_space<vmem>>, vector<1x128xf32>,
    %c0_8 = arith.constant 0 : index
    %c0_9 = arith.constant 0 : index
    %10 = vector.load %arg6[%c0_8, %c0_9] : memref<1x128xf32, #tpu.memory_space<vmem>>, vector<1x128xf32>
    %cst_10 = arith.constant dense<0.000000e+00> : vector<128xf32>
    %11 = vector.multi_reduction <add>, %4, %cst_10 [0] : vector<8x128xf32> to vector<128xf32>
    %12 = vector.shape_cast %11 : vector<128xf32> to vector<1x128xf32>
    %13 = arith.addf %10, %12 : vector<1x128xf32>
    %c0_11 = arith.constant 0 : index
    %c0_12 = arith.constant 0 : index
    %14 = vector.load %arg6[%c0_11, %c0_12] : memref<1x128xf32, #tpu.memory_space<vmem>>, vector<1x128xf32>
    tpu.vector_store %arg6[%c0_11, %c0_12], %13 {strides = array<i32>} : memref<1x128xf32, #tpu.memory_space<vmem>>, vector<1x128xf32>,
    %cst_13 = arith.constant dense<0.000000e+00> : vector<128x128xf32>
    %15 = tpu.matmul %3, %3, %cst_13 {dimension_numbers = #tpu.dot_dimension_numbers<[0], [0], [1], [1], [0, 1, 1, 1], [], []>} : vector<8x128xf32>, vector<8x128xf32>, vector<128x128xf32> -> vector<128x128xf32>
    %cst_14 = arith.constant dense<0.000000e+00> : vector<128x128xf32>
    %16 = tpu.matmul %4, %4, %cst_14 {dimension_numbers = #tpu.dot_dimension_numbers<[0], [0], [1], [1], [0, 1, 1, 1], [], []>} : vector<8x128xf32>, vector<8x128xf32>, vector<128x128xf32> -> vector<128x128xf32>
    %c0_15 = arith.constant 0 : index
    %c0_16 = arith.constant 0 : index
    %17 = vector.load %arg4[%c0_15, %c0_16] : memref<128x128xf32, #tpu.memory_space<vmem>>, vector<128x128xf32>
    %cst_17 = arith.constant 0.142857149 : f32
    %18 = vector.broadcast %cst_17 : f32 to vector<128x128xf32>
    %19 = arith.mulf %15, %18 : vector<128x128xf32>
    %cst_18 = arith.constant 0.142857149 : f32
    %20 = vector.broadcast %cst_18 : f32 to vector<128x128xf32>
    %21 = arith.mulf %16, %20 : vector<128x128xf32>
    %22 = arith.subf %19, %21 : vector<128x128xf32>
    %23 = arith.addf %17, %22 : vector<128x128xf32>
    %c0_19 = arith.constant 0 : index
    %c0_20 = arith.constant 0 : index
    %24 = vector.load %arg4[%c0_19, %c0_20] : memref<128x128xf32, #tpu.memory_space<vmem>>, vector<128x128xf32>
    tpu.vector_store %arg4[%c0_19, %c0_20], %23 {strides = array<i32>} : memref<128x128xf32, #tpu.memory_space<vmem>>, vector<128x128xf32>,
    %c0_i32_21 = arith.constant 0 : i32
    %25 = arith.cmpi eq, %arg0, %c0_i32_21 : i32
    %26 = arith.extui %25 : i1 to i32
    %c0_i32_22 = arith.constant 0 : i32
    %27 = arith.cmpi ne, %26, %c0_i32_22 : i32
    scf.if %27 {
      %c0_23 = arith.constant 0 : index
      %c0_24 = arith.constant 0 : index
      %28 = vector.load %arg5[%c0_23, %c0_24] : memref<1x128xf32, #tpu.memory_space<vmem>>, vector<1x128xf32>
      %c0_25 = arith.constant 0 : index
      %c0_26 = arith.constant 0 : index
      %29 = vector.load %arg6[%c0_25, %c0_26] : memref<1x128xf32, #tpu.memory_space<vmem>>, vector<1x128xf32>
      %cst_27 = arith.constant dense<0.000000e+00> : vector<128x128xf32>
      %30 = tpu.matmul %28, %28, %cst_27 {dimension_numbers = #tpu.dot_dimension_numbers<[0], [0], [1], [1], [0, 1, 1, 1], [], []>} : vector<1x128xf32>, vector<1x128xf32>, vector<128x128xf32> -> vector<128x128xf32>
      %cst_28 = arith.constant 0.0178571437 : f32
      %31 = vector.broadcast %cst_28 : f32 to vector<128x128xf32>
      %32 = arith.mulf %30, %31 : vector<128x128xf32>
      %cst_29 = arith.constant dense<0.000000e+00> : vector<128x128xf32>
      %33 = tpu.matmul %29, %29, %cst_29 {dimension_numbers = #tpu.dot_dimension_numbers<[0], [0], [1], [1], [0, 1, 1, 1], [], []>} : vector<1x128xf32>, vector<1x128xf32>, vector<128x128xf32> -> vector<128x128xf32>
      %cst_30 = arith.constant 0.0178571437 : f32
      %34 = vector.broadcast %cst_30 : f32 to vector<128x128xf32>
      %35 = arith.mulf %33, %34 : vector<128x128xf32>
      %c0_31 = arith.constant 0 : index
      %c0_32 = arith.constant 0 : index
      %36 = vector.load %arg4[%c0_31, %c0_32] : memref<128x128xf32, #tpu.memory_space<vmem>>, vector<128x128xf32>
      %37 = arith.subf %36, %32 : vector<128x128xf32>
      %38 = arith.addf %37, %35 : vector<128x128xf32>
      %39 = arith.mulf %38, %38 : vector<128x128xf32>
      %40 = vector.shape_cast %39 : vector<128x128xf32> to vector<1x128x128xf32>
      %cst_33 = arith.constant dense<0.000000e+00> : vector<1xf32>
      %41 = vector.multi_reduction <add>, %40, %cst_33 [1, 2] : vector<1x128x128xf32> to vector<1xf32>
      %42 = vector.shape_cast %41 : vector<1xf32> to vector<1x1x1xf32>
      %43 = vector.extract %42[0, 0, 0] : f32 from vector<1x1x1xf32>
      %44 = vector.broadcast %43 : f32 to vector<1x1xf32>
      %cst_34 = arith.constant 2.44140625E-4 : f32
      %45 = vector.broadcast %cst_34 : f32 to vector<1x1xf32>
      %46 = arith.mulf %44, %45 : vector<1x1xf32>
      %c0_35 = arith.constant 0 : index
      %c0_36 = arith.constant 0 : index
      %47 = vector.load %arg3[%c0_35, %c0_36] : memref<1x1xf32, #tpu.memory_space<vmem>>, vector<1x1xf32>
      tpu.vector_store %arg3[%c0_35, %c0_36], %46 {strides = array<i32>} : memref<1x1xf32, #tpu.memory_space<vmem>>, vector<1x1xf32>,
    } else {
    }
    return
  }
  func.func @transform_0(%arg0: i32) -> (i32, i32) {
    %c0_i32 = arith.constant 0 : i32
    %c0_i32_0 = arith.constant 0 : i32
    return %arg0, %c0_i32 : i32, i32
  }
  func.func @transform_1(%arg0: i32) -> (i32, i32) {
    %c0_i32 = arith.constant 0 : i32
    %c0_i32_0 = arith.constant 0 : i32
    return %arg0, %c0_i32 : i32, i32
  }
  func.func @transform_2(%arg0: i32) -> (i32, i32) {
    %c0_i32 = arith.constant 0 : i32
    %c0_i32_0 = arith.constant 0 : i32
    %c0_i32_1 = arith.constant 0 : i32
    return %c0_i32, %c0_i32_0 : i32, i32
  }
}

</mosaic_0001>

<llo_original>
// kernel: tpu_custom_call.1
$region0: #{tpu_custom_call.1}
  #allocation0 [shape = 'u32[]', space=smem, size = 0x4, offset = 0x4, fixed_abs, tag = 'smem constant byte address 0x4 - core index']
  #allocation1 [shape = 'u32[144,128]{1,0:T(1,128)}', space=vmem, size = 0x12000, scoped, tag = 'internal scratch']
  #allocation2 [shape = 'f32[128,128]{1,0:T(8,128)}', space=vmem, size = 0x10000, scoped, tag = 'scratch operand']
  #allocation3 [shape = 'f32[1,128]{1,0:T(1,128)}', space=vmem, size = 0x200, scoped, tag = 'scratch operand']
  #allocation4 [shape = 'f32[1,128]{1,0:T(1,128)}', space=vmem, size = 0x200, scoped, tag = 'scratch operand']
  %s0 = inlined_call_operand.hbm [shape: f32[8,128], index: 0, kind: input, shape index: {}]
  %s1 = inlined_call_operand.hbm [shape: f32[8,128], index: 1, kind: input, shape index: {}]
  %s2 = inlined_call_operand.hbm [shape: f32[1,1], index: 2, kind: output, shape index: {}]
  %s3 = sld [smem:[#allocation0]]
  $region34: #{tpu_custom_call.1} parent=0
    _
  %s5 = ssub.s32 1, %s3
  %s6 = scalar_select 0, %s5, %s3
  $region1: #{tpu_custom_call.1} parent=0
    #allocation5 [shape = 'u8[4096]{0}', space=vmem, size = 0x1000, scoped, tag = 'input window, operand 0, single buffered']
    #allocation6 [shape = 's32[1]{0}', space=sflag, size = 0x4, scoped, tag = 'scoped memory for tpu_custom_call.1']
    #allocation7 [shape = 's32[1]{0}', space=sflag, size = 0x4, scoped, tag = 'scoped memory for tpu_custom_call.1']
    #allocation8 [shape = 'u8[4096]{0}', space=vmem, size = 0x1000, scoped, tag = 'input window, operand 1, single buffered']
    #allocation9 [shape = 's32[1]{0}', space=sflag, size = 0x4, scoped, tag = 'scoped memory for tpu_custom_call.1']
    #allocation10 [shape = 'u8[512]{0}', space=vmem, size = 0x400, scoped, tag = 'output window, operand 0, single buffered']
    %7 = vsyncpa [#allocation6], 0
    %8 = vsyncpa [#allocation9], 0
    %9 = vsyncpa [#allocation7], 0
    // Predicated region
    $region2: #{tpu_custom_call.1} parent=1 // pred_check
      _
    $region3: #{tpu_custom_call.1} parent=1 // pred_check_branch
      %11 = sbr.rel (0) target = $region5
    $region4: #{tpu_custom_call.1} parent=1 // pred_region
      %s13 = ssub.s32 128, 128
      %14 = vsyncadd [#allocation6], %s13
      %s16 = sshll.u32 [#allocation5], 4
      %s17 = int_to_ptr.vmem [resolvable:$true] %s16
      %19 = dma.hbm_to_vmem [thread:$0]  %s0, 128, %s17, [#allocation6]
    $region5: #{tpu_custom_call.1} parent=1 // pred_fallthru
      _
    // Predicated region
    $region6: #{tpu_custom_call.1} parent=1 // pred_check
      _
    $region7: #{tpu_custom_call.1} parent=1 // pred_check_branch
      %21 = sbr.rel (0) target = $region9
    $region8: #{tpu_custom_call.1} parent=1 // pred_region
      %s23 = ssub.s32 128, 128
      %24 = vsyncadd [#allocation9], %s23
      %s26 = sshll.u32 [#allocation8], 4
      %s27 = int_to_ptr.vmem [resolvable:$true] %s26
      %29 = dma.hbm_to_vmem [thread:$0]  %s1, 128, %s27, [#allocation9]
    $region9: #{tpu_custom_call.1} parent=1 // pred_fallthru
      _
    // Predicated region
    $region10: #{tpu_custom_call.1} parent=1 // pred_check
      _
    $region11: #{tpu_custom_call.1} parent=1 // pred_check_branch
      %31 = sbr.rel (0) target = $region13
    $region12: #{tpu_custom_call.1} parent=1 // pred_region
      %32 = dma.done [#allocation6], 128
    $region13: #{tpu_custom_call.1} parent=1 // pred_fallthru
      _
    // Predicated region
    $region14: #{tpu_custom_call.1} parent=1 // pred_check
      _
    $region15: #{tpu_custom_call.1} parent=1 // pred_check_branch
      %34 = sbr.rel (0) target = $region17
    $region16: #{tpu_custom_call.1} parent=1 // pred_region
      %35 = dma.done [#allocation9], 128
    $region17: #{tpu_custom_call.1} parent=1 // pred_fallthru
      _
    %p36 = scmp.eq.s32.totalorder 0, 0
    // Predicated region
    $region18: #{tpu_custom_call.1} parent=1 // pred_check
      %p37 = pneg %p36
    $region19: #{tpu_custom_call.1} parent=1 // pred_check_branch
      %39 = sbr.rel (%p37) target = $region21
    $region20: #{tpu_custom_call.1} parent=1 // pred_region
      %40 = vst [vmem:[#allocation2] sm:$0xff] 0.0
      %41 = vst [vmem:[#allocation2 + $0x8] sm:$0xff] 0.0
      %42 = vst [vmem:[#allocation2 + $0x10] sm:$0xff] 0.0
      %43 = vst [vmem:[#allocation2 + $0x18] sm:$0xff] 0.0
      %44 = vst [vmem:[#allocation2 + $0x20] sm:$0xff] 0.0
      %45 = vst [vmem:[#allocation2 + $0x28] sm:$0xff] 0.0
      %46 = vst [vmem:[#allocation2 + $0x30] sm:$0xff] 0.0
      %47 = vst [vmem:[#allocation2 + $0x38] sm:$0xff] 0.0
      %48 = vst [vmem:[#allocation2 + $0x40] sm:$0xff] 0.0
      %49 = vst [vmem:[#allocation2 + $0x48] sm:$0xff] 0.0
      %50 = vst [vmem:[#allocation2 + $0x50] sm:$0xff] 0.0
      %51 = vst [vmem:[#allocation2 + $0x58] sm:$0xff] 0.0
      %52 = vst [vmem:[#allocation2 + $0x60] sm:$0xff] 0.0
      %53 = vst [vmem:[#allocation2 + $0x68] sm:$0xff] 0.0
      %54 = vst [vmem:[#allocation2 + $0x70] sm:$0xff] 0.0
      %55 = vst [vmem:[#allocation2 + $0x78] sm:$0xff] 0.0
      %56 = vst [vmem:[#allocation3] sm:$0x1] 0.0
      %57 = vst [vmem:[#allocation4] sm:$0x1] 0.0
    $region21: #{tpu_custom_call.1} parent=1 // pred_fallthru
      _
    %v58 = vld [vmem:[#allocation5] sm:$0xff]
    %v59 = vld [vmem:[#allocation8] sm:$0xff]
    %v60 = vld [vmem:[#allocation3] sm:$0x1]
    %v61 = vrot.slane %v58, 4
    %v62 = vadd.f32 %v58, %v61
    %v63 = vrot.slane %v62, 2
    %v64 = vadd.f32 %v62, %v63
    %v65 = vrot.slane %v64, 1
    %v66 = vadd.f32 %v64, %v65
    %v67 = vadd.f32 %v60, %v66
    %68 = vst [vmem:[#allocation3] sm:$0x1] %v67
    %v69 = vld [vmem:[#allocation4] sm:$0x1]
    %v70 = vrot.slane %v59, 4
    %v71 = vadd.f32 %v59, %v70
    %v72 = vrot.slane %v71, 2
    %v73 = vadd.f32 %v71, %v72
    %v74 = vrot.slane %v73, 1
    %v75 = vadd.f32 %v73, %v74
    %v76 = vadd.f32 %v69, %v75
    %77 = vst [vmem:[#allocation4] sm:$0x1] %v76
    %78 = vxpose.xlu0.b32.start [1/16] %v58, 128
    %79 = vxpose.xlu0.b32.cont [2/16] 0.0, 128
    %80 = vxpose.xlu0.b32.cont [3/16] 0.0, 128
    %81 = vxpose.xlu0.b32.cont [4/16] 0.0, 128
    %82 = vxpose.xlu0.b32.cont [5/16] 0.0, 128
    %83 = vxpose.xlu0.b32.cont [6/16] 0.0, 128
    %84 = vxpose.xlu0.b32.cont [7/16] 0.0, 128
    %85 = vxpose.xlu0.b32.cont [8/16] 0.0, 128
    %86 = vxpose.xlu0.b32.cont [9/16] 0.0, 128
    %87 = vxpose.xlu0.b32.cont [10/16] 0.0, 128
    %88 = vxpose.xlu0.b32.cont [11/16] 0.0, 128
    %89 = vxpose.xlu0.b32.cont [12/16] 0.0, 128
    %90 = vxpose.xlu0.b32.cont [13/16] 0.0, 128
    %91 = vxpose.xlu0.b32.cont [14/16] 0.0, 128
    %92 = vxpose.xlu0.b32.cont [15/16] 0.0, 128
    %93 = vxpose.xlu0.b32.end [16/16] 0.0, 128
    %v94 = vpop.trf.xlu0
    %v95 = vpop.trf.xlu0
    %v96 = vpop.trf.xlu0
    %v97 = vpop.trf.xlu0
    %v98 = vpop.trf.xlu0
    %v99 = vpop.trf.xlu0
    %v100 = vpop.trf.xlu0
    %v101 = vpop.trf.xlu0
    %v102 = vpop.trf.xlu0
    %v103 = vpop.trf.xlu0
    %v104 = vpop.trf.xlu0
    %v105 = vpop.trf.xlu0
    %v106 = vpop.trf.xlu0
    %v107 = vpop.trf.xlu0
    %v108 = vpop.trf.xlu0
    %v109 = vpop.trf.xlu0
    %vm110 = vcmask 64512
    %v112 = vsel %vm110, %v94, 0
    %v115 = vsel %vm110, %v95, 0
    %v118 = vsel %vm110, %v96, 0
    %v121 = vsel %vm110, %v97, 0
    %v124 = vsel %vm110, %v98, 0
    %v127 = vsel %vm110, %v99, 0
    %v130 = vsel %vm110, %v100, 0
    %v133 = vsel %vm110, %v101, 0
    %v136 = vsel %vm110, %v102, 0
    %v139 = vsel %vm110, %v103, 0
    %v142 = vsel %vm110, %v104, 0
    %v145 = vsel %vm110, %v105, 0
    %v148 = vsel %vm110, %v106, 0
    %v151 = vsel %vm110, %v107, 0
    %v154 = vsel %vm110, %v108, 0
    %v157 = vsel %vm110, %v109, 0
    %159 = vmatprep.subr.mxu0 0.0
    %160 = vmatpush1.msra.mxu0 %v58
    %161 = vmatprep.subr.mxu0 0.0
    %162 = vmatpush1.msra.mxu0 0.0
    %163 = vmatprep.subr.mxu0 0.0
    %164 = vmatpush1.msra.mxu0 0.0
    %165 = vmatprep.subr.mxu0 0.0
    %166 = vmatpush1.msra.mxu0 0.0
    %167 = vmatprep.subr.mxu0 0.0
    %168 = vmatpush1.msra.mxu0 0.0
    %169 = vmatprep.subr.mxu0 0.0
    %170 = vmatpush1.msra.mxu0 0.0
    %171 = vmatprep.subr.mxu0 0.0
    %172 = vmatpush1.msra.mxu0 0.0
    %173 = vmatprep.subr.mxu0 0.0
    %174 = vmatpush1.msra.mxu0 0.0
    %175 = vmatprep.subr.mxu0 0.0
    %176 = vmatpush1.msra.mxu0 0.0
    %177 = vmatprep.subr.mxu0 0.0
    %178 = vmatpush1.msra.mxu0 0.0
    %179 = vmatprep.subr.mxu0 0.0
    %180 = vmatpush1.msra.mxu0 0.0
    %181 = vmatprep.subr.mxu0 0.0
    %182 = vmatpush1.msra.mxu0 0.0
    %183 = vmatprep.subr.mxu0 0.0
    %184 = vmatpush1.msra.mxu0 0.0
    %185 = vmatprep.subr.mxu0 0.0
    %186 = vmatpush1.msra.mxu0 0.0
    %187 = vmatprep.subr.mxu0 0.0
    %188 = vmatpush1.msra.mxu0 0.0
    %189 = vmatprep.subr.mxu0 0.0
    %190 = vmatpush1.msra.mxu0 0.0
    %191 = vmatprep.subr.mxu0 0.0
    %192 = vmatpush1.msra.mxu0 0.0
    %193 = vmatprep.subr.mxu0 0.0
    %194 = vmatpush1.msra.mxu0 0.0
    %195 = vmatprep.subr.mxu0 0.0
    %196 = vmatpush1.msra.mxu0 0.0
    %197 = vmatprep.subr.mxu0 0.0
    %198 = vmatpush1.msra.mxu0 0.0
    %199 = vmatprep.subr.mxu0 0.0
    %200 = vmatpush1.msra.mxu0 0.0
    %201 = vmatprep.subr.mxu0 0.0
    %202 = vmatpush1.msra.mxu0 0.0
    %203 = vmatprep.subr.mxu0 0.0
    %204 = vmatpush1.msra.mxu0 0.0
    %205 = vmatprep.subr.mxu0 0.0
    %206 = vmatpush1.msra.mxu0 0.0
    %207 = vmatprep.subr.mxu0 0.0
    %208 = vmatpush1.msra.mxu0 0.0
    %209 = vmatprep.subr.mxu0 0.0
    %210 = vmatpush1.msra.mxu0 0.0
    %211 = vmatprep.subr.mxu0 0.0
    %212 = vmatpush1.msra.mxu0 0.0
    %213 = vmatprep.subr.mxu0 0.0
    %214 = vmatpush1.msra.mxu0 0.0
    %215 = vmatprep.subr.mxu0 0.0
    %216 = vmatpush1.msra.mxu0 0.0
    %217 = vmatprep.subr.mxu0 0.0
    %218 = vmatpush1.msra.mxu0 0.0
    %219 = vmatprep.subr.mxu0 0.0
    %220 = vmatpush1.msra.mxu0 0.0
    %221 = vmatprep.subr.mxu0 0.0
    %222 = vmatpush1.msra.mxu0 0.0
    %223 = vmatprep.mubr.f32.mxu0 0.0
    %224 = vmatmul.mubr.f32.gmra.mrb[0].mxu0 %v112
    %v225 = vpop.f32.mrb[0].mxu0
    %v226 = vadd.f32 0.0, %v225
    %v227 = vpop.f32.mrb[0].mxu0
    %228 = vmatprep.mubr.f32.mxu0 0.0
    %229 = vmatmul.mubr.f32.gmra.mrb[0].mxu0 %v115
    %v230 = vpop.f32.mrb[0].mxu0
    %v231 = vadd.f32 0.0, %v230
    %v232 = vpop.f32.mrb[0].mxu0
    %233 = vmatprep.mubr.f32.mxu0 0.0
    %234 = vmatmul.mubr.f32.gmra.mrb[0].mxu0 %v118
    %v235 = vpop.f32.mrb[0].mxu0
    %v236 = vadd.f32 0.0, %v235
    %v237 = vpop.f32.mrb[0].mxu0
    %238 = vmatprep.mubr.f32.mxu0 0.0
    %239 = vmatmul.mubr.f32.gmra.mrb[0].mxu0 %v121
    %v240 = vpop.f32.mrb[0].mxu0
    %v241 = vadd.f32 0.0, %v240
    %v242 = vpop.f32.mrb[0].mxu0
    %243 = vmatprep.mubr.f32.mxu0 0.0
    %244 = vmatmul.mubr.f32.gmra.mrb[0].mxu0 %v124
    %v245 = vpop.f32.mrb[0].mxu0
    %v246 = vadd.f32 0.0, %v245
    %v247 = vpop.f32.mrb[0].mxu0
    %248 = vmatprep.mubr.f32.mxu0 0.0
    %249 = vmatmul.mubr.f32.gmra.mrb[0].mxu0 %v127
    %v250 = vpop.f32.mrb[0].mxu0
    %v251 = vadd.f32 0.0, %v250
    %v252 = vpop.f32.mrb[0].mxu0
    %253 = vmatprep.mubr.f32.mxu0 0.0
    %254 = vmatmul.mubr.f32.gmra.mrb[0].mxu0 %v130
    %v255 = vpop.f32.mrb[0].mxu0
    %v256 = vadd.f32 0.0, %v255
    %v257 = vpop.f32.mrb[0].mxu0
    %258 = vmatprep.mubr.f32.mxu0 0.0
    %259 = vmatmul.mubr.f32.gmra.mrb[0].mxu0 %v133
    %v260 = vpop.f32.mrb[0].mxu0
    %v261 = vadd.f32 0.0, %v260
    %v262 = vpop.f32.mrb[0].mxu0
    %263 = vmatprep.mubr.f32.mxu0 0.0
    %264 = vmatmul.mubr.f32.gmra.mrb[0].mxu0 %v136
    %v265 = vpop.f32.mrb[0].mxu0
    %v266 = vadd.f32 0.0, %v265
    %v267 = vpop.f32.mrb[0].mxu0
    %268 = vmatprep.mubr.f32.mxu0 0.0
    %269 = vmatmul.mubr.f32.gmra.mrb[0].mxu0 %v139
    %v270 = vpop.f32.mrb[0].mxu0
    %v271 = vadd.f32 0.0, %v270
    %v272 = vpop.f32.mrb[0].mxu0
    %273 = vmatprep.mubr.f32.mxu0 0.0
    %274 = vmatmul.mubr.f32.gmra.mrb[0].mxu0 %v142
    %v275 = vpop.f32.mrb[0].mxu0
    %v276 = vadd.f32 0.0, %v275
    %v277 = vpop.f32.mrb[0].mxu0
    %278 = vmatprep.mubr.f32.mxu0 0.0
    %279 = vmatmul.mubr.f32.gmra.mrb[0].mxu0 %v145
    %v280 = vpop.f32.mrb[0].mxu0
    %v281 = vadd.f32 0.0, %v280
    %v282 = vpop.f32.mrb[0].mxu0
    %283 = vmatprep.mubr.f32.mxu0 0.0
    %284 = vmatmul.mubr.f32.gmra.mrb[0].mxu0 %v148
    %v285 = vpop.f32.mrb[0].mxu0
    %v286 = vadd.f32 0.0, %v285
    %v287 = vpop.f32.mrb[0].mxu0
    %288 = vmatprep.mubr.f32.mxu0 0.0
    %289 = vmatmul.mubr.f32.gmra.mrb[0].mxu0 %v151
    %v290 = vpop.f32.mrb[0].mxu0
    %v291 = vadd.f32 0.0, %v290
    %v292 = vpop.f32.mrb[0].mxu0
    %293 = vmatprep.mubr.f32.mxu0 0.0
    %294 = vmatmul.mubr.f32.gmra.mrb[0].mxu0 %v154
    %v295 = vpop.f32.mrb[0].mxu0
    %v296 = vadd.f32 0.0, %v295
    %v297 = vpop.f32.mrb[0].mxu0
    %298 = vmatprep.mubr.f32.mxu0 0.0
    %299 = vmatmul.mubr.f32.gmra.mrb[0].mxu0 %v157
    %v300 = vpop.f32.mrb[0].mxu0
    %v301 = vadd.f32 0.0, %v300
    %v302 = vpop.f32.mrb[0].mxu0
    %303 = vdwg.mxu0
    %304 = vxpose.xlu0.b32.start [1/16] %v59, 128
    %305 = vxpose.xlu0.b32.cont [2/16] 0.0, 128
    %306 = vxpose.xlu0.b32.cont [3/16] 0.0, 128
    %307 = vxpose.xlu0.b32.cont [4/16] 0.0, 128
    %308 = vxpose.xlu0.b32.cont [5/16] 0.0, 128
    %309 = vxpose.xlu0.b32.cont [6/16] 0.0, 128
    %310 = vxpose.xlu0.b32.cont [7/16] 0.0, 128
    %311 = vxpose.xlu0.b32.cont [8/16] 0.0, 128
    %312 = vxpose.xlu0.b32.cont [9/16] 0.0, 128
    %313 = vxpose.xlu0.b32.cont [10/16] 0.0, 128
    %314 = vxpose.xlu0.b32.cont [11/16] 0.0, 128
    %315 = vxpose.xlu0.b32.cont [12/16] 0.0, 128
    %316 = vxpose.xlu0.b32.cont [13/16] 0.0, 128
    %317 = vxpose.xlu0.b32.cont [14/16] 0.0, 128
    %318 = vxpose.xlu0.b32.cont [15/16] 0.0, 128
    %319 = vxpose.xlu0.b32.end [16/16] 0.0, 128
    %v320 = vpop.trf.xlu0
    %v321 = vpop.trf.xlu0
    %v322 = vpop.trf.xlu0
    %v323 = vpop.trf.xlu0
    %v324 = vpop.trf.xlu0
    %v325 = vpop.trf.xlu0
    %v326 = vpop.trf.xlu0
    %v327 = vpop.trf.xlu0
    %v328 = vpop.trf.xlu0
    %v329 = vpop.trf.xlu0
    %v330 = vpop.trf.xlu0
    %v331 = vpop.trf.xlu0
    %v332 = vpop.trf.xlu0
    %v333 = vpop.trf.xlu0
    %v334 = vpop.trf.xlu0
    %v335 = vpop.trf.xlu0
    %v337 = vsel %vm110, %v320, 0
    %v340 = vsel %vm110, %v321, 0
    %v343 = vsel %vm110, %v322, 0
    %v346 = vsel %vm110, %v323, 0
    %v349 = vsel %vm110, %v324, 0
    %v352 = vsel %vm110, %v325, 0
    %v355 = vsel %vm110, %v326, 0
    %v358 = vsel %vm110, %v327, 0
    %v361 = vsel %vm110, %v328, 0
    %v364 = vsel %vm110, %v329, 0
    %v367 = vsel %vm110, %v330, 0
    %v370 = vsel %vm110, %v331, 0
    %v373 = vsel %vm110, %v332, 0
    %v376 = vsel %vm110, %v333, 0
    %v379 = vsel %vm110, %v334, 0
    %v382 = vsel %vm110, %v335, 0
    %384 = vmatprep.subr.mxu0 0.0
    %385 = vmatpush1.msra.mxu0 %v59
    %386 = vmatprep.subr.mxu0 0.0
    %387 = vmatpush1.msra.mxu0 0.0
    %388 = vmatprep.subr.mxu0 0.0
    %389 = vmatpush1.msra.mxu0 0.0
    %390 = vmatprep.subr.mxu0 0.0
    %391 = vmatpush1.msra.mxu0 0.0
    %392 = vmatprep.subr.mxu0 0.0
    %393 = vmatpush1.msra.mxu0 0.0
    %394 = vmatprep.subr.mxu0 0.0
    %395 = vmatpush1.msra.mxu0 0.0
    %396 = vmatprep.subr.mxu0 0.0
    %397 = vmatpush1.msra.mxu0 0.0
    %398 = vmatprep.subr.mxu0 0.0
    %399 = vmatpush1.msra.mxu0 0.0
    %400 = vmatprep.subr.mxu0 0.0
    %401 = vmatpush1.msra.mxu0 0.0
    %402 = vmatprep.subr.mxu0 0.0
    %403 = vmatpush1.msra.mxu0 0.0
    %404 = vmatprep.subr.mxu0 0.0
    %405 = vmatpush1.msra.mxu0 0.0
    %406 = vmatprep.subr.mxu0 0.0
    %407 = vmatpush1.msra.mxu0 0.0
    %408 = vmatprep.subr.mxu0 0.0
    %409 = vmatpush1.msra.mxu0 0.0
    %410 = vmatprep.subr.mxu0 0.0
    %411 = vmatpush1.msra.mxu0 0.0
    %412 = vmatprep.subr.mxu0 0.0
    %413 = vmatpush1.msra.mxu0 0.0
    %414 = vmatprep.subr.mxu0 0.0
    %415 = vmatpush1.msra.mxu0 0.0
    %416 = vmatprep.subr.mxu0 0.0
    %417 = vmatpush1.msra.mxu0 0.0
    %418 = vmatprep.subr.mxu0 0.0
    %419 = vmatpush1.msra.mxu0 0.0
    %420 = vmatprep.subr.mxu0 0.0
    %421 = vmatpush1.msra.mxu0 0.0
    %422 = vmatprep.subr.mxu0 0.0
    %423 = vmatpush1.msra.mxu0 0.0
    %424 = vmatprep.subr.mxu0 0.0
    %425 = vmatpush1.msra.mxu0 0.0
    %426 = vmatprep.subr.mxu0 0.0
    %427 = vmatpush1.msra.mxu0 0.0
    %428 = vmatprep.subr.mxu0 0.0
    %429 = vmatpush1.msra.mxu0 0.0
    %430 = vmatprep.subr.mxu0 0.0
    %431 = vmatpush1.msra.mxu0 0.0
    %432 = vmatprep.subr.mxu0 0.0
    %433 = vmatpush1.msra.mxu0 0.0
    %434 = vmatprep.subr.mxu0 0.0
    %435 = vmatpush1.msra.mxu0 0.0
    %436 = vmatprep.subr.mxu0 0.0
    %437 = vmatpush1.msra.mxu0 0.0
    %438 = vmatprep.subr.mxu0 0.0
    %439 = vmatpush1.msra.mxu0 0.0
    %440 = vmatprep.subr.mxu0 0.0
    %441 = vmatpush1.msra.mxu0 0.0
    %442 = vmatprep.subr.mxu0 0.0
    %443 = vmatpush1.msra.mxu0 0.0
    %444 = vmatprep.subr.mxu0 0.0
    %445 = vmatpush1.msra.mxu0 0.0
    %446 = vmatprep.subr.mxu0 0.0
    %447 = vmatpush1.msra.mxu0 0.0
    %448 = vmatprep.mubr.f32.mxu0 0.0
    %449 = vmatmul.mubr.f32.gmra.mrb[0].mxu0 %v337
    %v450 = vpop.f32.mrb[0].mxu0
    %v451 = vadd.f32 0.0, %v450
    %v452 = vpop.f32.mrb[0].mxu0
    %453 = vmatprep.mubr.f32.mxu0 0.0
    %454 = vmatmul.mubr.f32.gmra.mrb[0].mxu0 %v340
    %v455 = vpop.f32.mrb[0].mxu0
    %v456 = vadd.f32 0.0, %v455
    %v457 = vpop.f32.mrb[0].mxu0
    %458 = vmatprep.mubr.f32.mxu0 0.0
    %459 = vmatmul.mubr.f32.gmra.mrb[0].mxu0 %v343
    %v460 = vpop.f32.mrb[0].mxu0
    %v461 = vadd.f32 0.0, %v460
    %v462 = vpop.f32.mrb[0].mxu0
    %463 = vmatprep.mubr.f32.mxu0 0.0
    %464 = vmatmul.mubr.f32.gmra.mrb[0].mxu0 %v346
    %v465 = vpop.f32.mrb[0].mxu0
    %v466 = vadd.f32 0.0, %v465
    %v467 = vpop.f32.mrb[0].mxu0
    %468 = vmatprep.mubr.f32.mxu0 0.0
    %469 = vmatmul.mubr.f32.gmra.mrb[0].mxu0 %v349
    %v470 = vpop.f32.mrb[0].mxu0
    %v471 = vadd.f32 0.0, %v470
    %v472 = vpop.f32.mrb[0].mxu0
    %473 = vmatprep.mubr.f32.mxu0 0.0
    %474 = vmatmul.mubr.f32.gmra.mrb[0].mxu0 %v352
    %v475 = vpop.f32.mrb[0].mxu0
    %v476 = vadd.f32 0.0, %v475
    %v477 = vpop.f32.mrb[0].mxu0
    %478 = vmatprep.mubr.f32.mxu0 0.0
    %479 = vmatmul.mubr.f32.gmra.mrb[0].mxu0 %v355
    %v480 = vpop.f32.mrb[0].mxu0
    %v481 = vadd.f32 0.0, %v480
    %v482 = vpop.f32.mrb[0].mxu0
    %483 = vmatprep.mubr.f32.mxu0 0.0
    %484 = vmatmul.mubr.f32.gmra.mrb[0].mxu0 %v358
    %v485 = vpop.f32.mrb[0].mxu0
    %v486 = vadd.f32 0.0, %v485
    %v487 = vpop.f32.mrb[0].mxu0
    %488 = vmatprep.mubr.f32.mxu0 0.0
    %489 = vmatmul.mubr.f32.gmra.mrb[0].mxu0 %v361
    %v490 = vpop.f32.mrb[0].mxu0
    %v491 = vadd.f32 0.0, %v490
    %v492 = vpop.f32.mrb[0].mxu0
    %493 = vmatprep.mubr.f32.mxu0 0.0
    %494 = vmatmul.mubr.f32.gmra.mrb[0].mxu0 %v364
    %v495 = vpop.f32.mrb[0].mxu0
    %v496 = vadd.f32 0.0, %v495
    %v497 = vpop.f32.mrb[0].mxu0
    %498 = vmatprep.mubr.f32.mxu0 0.0
    %499 = vmatmul.mubr.f32.gmra.mrb[0].mxu0 %v367
    %v500 = vpop.f32.mrb[0].mxu0
    %v501 = vadd.f32 0.0, %v500
    %v502 = vpop.f32.mrb[0].mxu0
    %503 = vmatprep.mubr.f32.mxu0 0.0
    %504 = vmatmul.mubr.f32.gmra.mrb[0].mxu0 %v370
    %v505 = vpop.f32.mrb[0].mxu0
    %v506 = vadd.f32 0.0, %v505
    %v507 = vpop.f32.mrb[0].mxu0
    %508 = vmatprep.mubr.f32.mxu0 0.0
    %509 = vmatmul.mubr.f32.gmra.mrb[0].mxu0 %v373
    %v510 = vpop.f32.mrb[0].mxu0
    %v511 = vadd.f32 0.0, %v510
    %v512 = vpop.f32.mrb[0].mxu0
    %513 = vmatprep.mubr.f32.mxu0 0.0
    %514 = vmatmul.mubr.f32.gmra.mrb[0].mxu0 %v376
    %v515 = vpop.f32.mrb[0].mxu0
    %v516 = vadd.f32 0.0, %v515
    %v517 = vpop.f32.mrb[0].mxu0
    %518 = vmatprep.mubr.f32.mxu0 0.0
    %519 = vmatmul.mubr.f32.gmra.mrb[0].mxu0 %v379
    %v520 = vpop.f32.mrb[0].mxu0
    %v521 = vadd.f32 0.0, %v520
    %v522 = vpop.f32.mrb[0].mxu0
    %523 = vmatprep.mubr.f32.mxu0 0.0
    %524 = vmatmul.mubr.f32.gmra.mrb[0].mxu0 %v382
    %v525 = vpop.f32.mrb[0].mxu0
    %v526 = vadd.f32 0.0, %v525
    %v527 = vpop.f32.mrb[0].mxu0
    %528 = vdwg.mxu0
    %v529 = vld [vmem:[#allocation2] sm:$0xff]
    %v530 = vld [vmem:[#allocation2 + $0x8] sm:$0xff]
    %v531 = vld [vmem:[#allocation2 + $0x10] sm:$0xff]
    %v532 = vld [vmem:[#allocation2 + $0x18] sm:$0xff]
    %v533 = vld [vmem:[#allocation2 + $0x20] sm:$0xff]
    %v534 = vld [vmem:[#allocation2 + $0x28] sm:$0xff]
    %v535 = vld [vmem:[#allocation2 + $0x30] sm:$0xff]
    %v536 = vld [vmem:[#allocation2 + $0x38] sm:$0xff]
    %v537 = vld [vmem:[#allocation2 + $0x40] sm:$0xff]
    %v538 = vld [vmem:[#allocation2 + $0x48] sm:$0xff]
    %v539 = vld [vmem:[#allocation2 + $0x50] sm:$0xff]
    %v540 = vld [vmem:[#allocation2 + $0x58] sm:$0xff]
    %v541 = vld [vmem:[#allocation2 + $0x60] sm:$0xff]
    %v542 = vld [vmem:[#allocation2 + $0x68] sm:$0xff]
    %v543 = vld [vmem:[#allocation2 + $0x70] sm:$0xff]
    %v544 = vld [vmem:[#allocation2 + $0x78] sm:$0xff]
    %v545 = vmul.f32 %v226, 0.14285715
    %v546 = vmul.f32 %v231, 0.14285715
    %v547 = vmul.f32 %v236, 0.14285715
    %v548 = vmul.f32 %v241, 0.14285715
    %v549 = vmul.f32 %v246, 0.14285715
    %v550 = vmul.f32 %v251, 0.14285715
    %v551 = vmul.f32 %v256, 0.14285715
    %v552 = vmul.f32 %v261, 0.14285715
    %v553 = vmul.f32 %v266, 0.14285715
    %v554 = vmul.f32 %v271, 0.14285715
    %v555 = vmul.f32 %v276, 0.14285715
    %v556 = vmul.f32 %v281, 0.14285715
    %v557 = vmul.f32 %v286, 0.14285715
    %v558 = vmul.f32 %v291, 0.14285715
    %v559 = vmul.f32 %v296, 0.14285715
    %v560 = vmul.f32 %v301, 0.14285715
    %v561 = vmul.f32 %v451, 0.14285715
    %v562 = vmul.f32 %v456, 0.14285715
    %v563 = vmul.f32 %v461, 0.14285715
    %v564 = vmul.f32 %v466, 0.14285715
    %v565 = vmul.f32 %v471, 0.14285715
    %v566 = vmul.f32 %v476, 0.14285715
    %v567 = vmul.f32 %v481, 0.14285715
    %v568 = vmul.f32 %v486, 0.14285715
    %v569 = vmul.f32 %v491, 0.14285715
    %v570 = vmul.f32 %v496, 0.14285715
    %v571 = vmul.f32 %v501, 0.14285715
    %v572 = vmul.f32 %v506, 0.14285715
    %v573 = vmul.f32 %v511, 0.14285715
    %v574 = vmul.f32 %v516, 0.14285715
    %v575 = vmul.f32 %v521, 0.14285715
    %v576 = vmul.f32 %v526, 0.14285715
    %v577 = vsub.f32 %v545, %v561
    %v578 = vsub.f32 %v546, %v562
    %v579 = vsub.f32 %v547, %v563
    %v580 = vsub.f32 %v548, %v564
    %v581 = vsub.f32 %v549, %v565
    %v582 = vsub.f32 %v550, %v566
    %v583 = vsub.f32 %v551, %v567
    %v584 = vsub.f32 %v552, %v568
    %v585 = vsub.f32 %v553, %v569
    %v586 = vsub.f32 %v554, %v570
    %v587 = vsub.f32 %v555, %v571
    %v588 = vsub.f32 %v556, %v572
    %v589 = vsub.f32 %v557, %v573
    %v590 = vsub.f32 %v558, %v574
    %v591 = vsub.f32 %v559, %v575
    %v592 = vsub.f32 %v560, %v576
    %v593 = vadd.f32 %v529, %v577
    %v594 = vadd.f32 %v530, %v578
    %v595 = vadd.f32 %v531, %v579
    %v596 = vadd.f32 %v532, %v580
    %v597 = vadd.f32 %v533, %v581
    %v598 = vadd.f32 %v534, %v582
    %v599 = vadd.f32 %v535, %v583
    %v600 = vadd.f32 %v536, %v584
    %v601 = vadd.f32 %v537, %v585
    %v602 = vadd.f32 %v538, %v586
    %v603 = vadd.f32 %v539, %v587
    %v604 = vadd.f32 %v540, %v588
    %v605 = vadd.f32 %v541, %v589
    %v606 = vadd.f32 %v542, %v590
    %v607 = vadd.f32 %v543, %v591
    %v608 = vadd.f32 %v544, %v592
    %609 = vst [vmem:[#allocation2] sm:$0xff] %v593
    %610 = vst [vmem:[#allocation2 + $0x8] sm:$0xff] %v594
    %611 = vst [vmem:[#allocation2 + $0x10] sm:$0xff] %v595
    %612 = vst [vmem:[#allocation2 + $0x18] sm:$0xff] %v596
    %613 = vst [vmem:[#allocation2 + $0x20] sm:$0xff] %v597
    %614 = vst [vmem:[#allocation2 + $0x28] sm:$0xff] %v598
    %615 = vst [vmem:[#allocation2 + $0x30] sm:$0xff] %v599
    %616 = vst [vmem:[#allocation2 + $0x38] sm:$0xff] %v600
    %617 = vst [vmem:[#allocation2 + $0x40] sm:$0xff] %v601
    %618 = vst [vmem:[#allocation2 + $0x48] sm:$0xff] %v602
    %619 = vst [vmem:[#allocation2 + $0x50] sm:$0xff] %v603
    %620 = vst [vmem:[#allocation2 + $0x58] sm:$0xff] %v604
    %621 = vst [vmem:[#allocation2 + $0x60] sm:$0xff] %v605
    %622 = vst [vmem:[#allocation2 + $0x68] sm:$0xff] %v606
    %623 = vst [vmem:[#allocation2 + $0x70] sm:$0xff] %v607
    %624 = vst [vmem:[#allocation2 + $0x78] sm:$0xff] %v608
    // Predicated region
    $region22: #{tpu_custom_call.1} parent=1 // pred_check
      %p625 = pneg %p36
    $region23: #{tpu_custom_call.1} parent=1 // pred_check_branch
      %627 = sbr.rel (%p625) target = $region25
    $region24: #{tpu_custom_call.1} parent=1 // pred_region
      %v628 = vld [vmem:[#allocation3] sm:$0x1]
      %v629 = vld [vmem:[#allocation4] sm:$0x1]
      %630 = vxpose.xlu0.b32.start [1/16] %v628, 128
      %631 = vxpose.xlu0.b32.cont [2/16] 0.0, 128
      %632 = vxpose.xlu0.b32.cont [3/16] 0.0, 128
      %633 = vxpose.xlu0.b32.cont [4/16] 0.0, 128
      %634 = vxpose.xlu0.b32.cont [5/16] 0.0, 128
      %635 = vxpose.xlu0.b32.cont [6/16] 0.0, 128
      %636 = vxpose.xlu0.b32.cont [7/16] 0.0, 128
      %637 = vxpose.xlu0.b32.cont [8/16] 0.0, 128
      %638 = vxpose.xlu0.b32.cont [9/16] 0.0, 128
      %639 = vxpose.xlu0.b32.cont [10/16] 0.0, 128
      %640 = vxpose.xlu0.b32.cont [11/16] 0.0, 128
      %641 = vxpose.xlu0.b32.cont [12/16] 0.0, 128
      %642 = vxpose.xlu0.b32.cont [13/16] 0.0, 128
      %643 = vxpose.xlu0.b32.cont [14/16] 0.0, 128
      %644 = vxpose.xlu0.b32.cont [15/16] 0.0, 128
      %645 = vxpose.xlu0.b32.end [16/16] 0.0, 128
      %v646 = vpop.trf.xlu0
      %v647 = vpop.trf.xlu0
      %v648 = vpop.trf.xlu0
      %v649 = vpop.trf.xlu0
      %v650 = vpop.trf.xlu0
      %v651 = vpop.trf.xlu0
      %v652 = vpop.trf.xlu0
      %v653 = vpop.trf.xlu0
      %v654 = vpop.trf.xlu0
      %v655 = vpop.trf.xlu0
      %v656 = vpop.trf.xlu0
      %v657 = vpop.trf.xlu0
      %v658 = vpop.trf.xlu0
      %v659 = vpop.trf.xlu0
      %v660 = vpop.trf.xlu0
      %v661 = vpop.trf.xlu0
      %vm662 = vcmask 7168
      %v664 = vsel %vm662, %v646, 0
      %v667 = vsel %vm662, %v647, 0
      %v670 = vsel %vm662, %v648, 0
      %v673 = vsel %vm662, %v649, 0
      %v676 = vsel %vm662, %v650, 0
      %v679 = vsel %vm662, %v651, 0
      %v682 = vsel %vm662, %v652, 0
      %v685 = vsel %vm662, %v653, 0
      %v688 = vsel %vm662, %v654, 0
      %v691 = vsel %vm662, %v655, 0
      %v694 = vsel %vm662, %v656, 0
      %v697 = vsel %vm662, %v657, 0
      %v700 = vsel %vm662, %v658, 0
      %v703 = vsel %vm662, %v659, 0
      %v706 = vsel %vm662, %v660, 0
      %v709 = vsel %vm662, %v661, 0
      %vm711 = vcmask 1040384
      %v713 = vsel %vm711, %v628, 0
      %715 = vmatprep.subr.mxu0 0.0
      %716 = vmatpush1.msra.mxu0 %v713
      %717 = vmatprep.subr.mxu0 0.0
      %718 = vmatpush1.msra.mxu0 0.0
      %719 = vmatprep.subr.mxu0 0.0
      %720 = vmatpush1.msra.mxu0 0.0
      %721 = vmatprep.subr.mxu0 0.0
      %722 = vmatpush1.msra.mxu0 0.0
      %723 = vmatprep.subr.mxu0 0.0
      %724 = vmatpush1.msra.mxu0 0.0
      %725 = vmatprep.subr.mxu0 0.0
      %726 = vmatpush1.msra.mxu0 0.0
      %727 = vmatprep.subr.mxu0 0.0
      %728 = vmatpush1.msra.mxu0 0.0
      %729 = vmatprep.subr.mxu0 0.0
      %730 = vmatpush1.msra.mxu0 0.0
      %731 = vmatprep.subr.mxu0 0.0
      %732 = vmatpush1.msra.mxu0 0.0
      %733 = vmatprep.subr.mxu0 0.0
      %734 = vmatpush1.msra.mxu0 0.0
      %735 = vmatprep.subr.mxu0 0.0
      %736 = vmatpush1.msra.mxu0 0.0
      %737 = vmatprep.subr.mxu0 0.0
      %738 = vmatpush1.msra.mxu0 0.0
      %739 = vmatprep.subr.mxu0 0.0
      %740 = vmatpush1.msra.mxu0 0.0
      %741 = vmatprep.subr.mxu0 0.0
      %742 = vmatpush1.msra.mxu0 0.0
      %743 = vmatprep.subr.mxu0 0.0
      %744 = vmatpush1.msra.mxu0 0.0
      %745 = vmatprep.subr.mxu0 0.0
      %746 = vmatpush1.msra.mxu0 0.0
      %747 = vmatprep.subr.mxu0 0.0
      %748 = vmatpush1.msra.mxu0 0.0
      %749 = vmatprep.subr.mxu0 0.0
      %750 = vmatpush1.msra.mxu0 0.0
      %751 = vmatprep.subr.mxu0 0.0
      %752 = vmatpush1.msra.mxu0 0.0
      %753 = vmatprep.subr.mxu0 0.0
      %754 = vmatpush1.msra.mxu0 0.0
      %755 = vmatprep.subr.mxu0 0.0
      %756 = vmatpush1.msra.mxu0 0.0
      %757 = vmatprep.subr.mxu0 0.0
      %758 = vmatpush1.msra.mxu0 0.0
      %759 = vmatprep.subr.mxu0 0.0
      %760 = vmatpush1.msra.mxu0 0.0
      %761 = vmatprep.subr.mxu0 0.0
      %762 = vmatpush1.msra.mxu0 0.0
      %763 = vmatprep.subr.mxu0 0.0
      %764 = vmatpush1.msra.mxu0 0.0
      %765 = vmatprep.subr.mxu0 0.0
      %766 = vmatpush1.msra.mxu0 0.0
      %767 = vmatprep.subr.mxu0 0.0
      %768 = vmatpush1.msra.mxu0 0.0
      %769 = vmatprep.subr.mxu0 0.0
      %770 = vmatpush1.msra.mxu0 0.0
      %771 = vmatprep.subr.mxu0 0.0
      %772 = vmatpush1.msra.mxu0 0.0
      %773 = vmatprep.subr.mxu0 0.0
      %774 = vmatpush1.msra.mxu0 0.0
      %775 = vmatprep.subr.mxu0 0.0
      %776 = vmatpush1.msra.mxu0 0.0
      %777 = vmatprep.subr.mxu0 0.0
      %778 = vmatpush1.msra.mxu0 0.0
      %779 = vmatprep.mubr.f32.mxu0 0.0
      %780 = vmatmul.mubr.f32.gmra.mrb[0].mxu0 %v664
      %v781 = vpop.f32.mrb[0].mxu0
      %v782 = vadd.f32 0.0, %v781
      %v783 = vpop.f32.mrb[0].mxu0
      %784 = vmatprep.mubr.f32.mxu0 0.0
      %785 = vmatmul.mubr.f32.gmra.mrb[0].mxu0 %v667
      %v786 = vpop.f32.mrb[0].mxu0
      %v787 = vadd.f32 0.0, %v786
      %v788 = vpop.f32.mrb[0].mxu0
      %789 = vmatprep.mubr.f32.mxu0 0.0
      %790 = vmatmul.mubr.f32.gmra.mrb[0].mxu0 %v670
      %v791 = vpop.f32.mrb[0].mxu0
      %v792 = vadd.f32 0.0, %v791
      %v793 = vpop.f32.mrb[0].mxu0
      %794 = vmatprep.mubr.f32.mxu0 0.0
      %795 = vmatmul.mubr.f32.gmra.mrb[0].mxu0 %v673
      %v796 = vpop.f32.mrb[0].mxu0
      %v797 = vadd.f32 0.0, %v796
      %v798 = vpop.f32.mrb[0].mxu0
      %799 = vmatprep.mubr.f32.mxu0 0.0
      %800 = vmatmul.mubr.f32.gmra.mrb[0].mxu0 %v676
      %v801 = vpop.f32.mrb[0].mxu0
      %v802 = vadd.f32 0.0, %v801
      %v803 = vpop.f32.mrb[0].mxu0
      %804 = vmatprep.mubr.f32.mxu0 0.0
      %805 = vmatmul.mubr.f32.gmra.mrb[0].mxu0 %v679
      %v806 = vpop.f32.mrb[0].mxu0
      %v807 = vadd.f32 0.0, %v806
      %v808 = vpop.f32.mrb[0].mxu0
      %809 = vmatprep.mubr.f32.mxu0 0.0
      %810 = vmatmul.mubr.f32.gmra.mrb[0].mxu0 %v682
      %v811 = vpop.f32.mrb[0].mxu0
      %v812 = vadd.f32 0.0, %v811
      %v813 = vpop.f32.mrb[0].mxu0
      %814 = vmatprep.mubr.f32.mxu0 0.0
      %815 = vmatmul.mubr.f32.gmra.mrb[0].mxu0 %v685
      %v816 = vpop.f32.mrb[0].mxu0
      %v817 = vadd.f32 0.0, %v816
      %v818 = vpop.f32.mrb[0].mxu0
      %819 = vmatprep.mubr.f32.mxu0 0.0
      %820 = vmatmul.mubr.f32.gmra.mrb[0].mxu0 %v688
      %v821 = vpop.f32.mrb[0].mxu0
      %v822 = vadd.f32 0.0, %v821
      %v823 = vpop.f32.mrb[0].mxu0
      %824 = vmatprep.mubr.f32.mxu0 0.0
      %825 = vmatmul.mubr.f32.gmra.mrb[0].mxu0 %v691
      %v826 = vpop.f32.mrb[0].mxu0
      %v827 = vadd.f32 0.0, %v826
      %v828 = vpop.f32.mrb[0].mxu0
      %829 = vmatprep.mubr.f32.mxu0 0.0
      %830 = vmatmul.mubr.f32.gmra.mrb[0].mxu0 %v694
      %v831 = vpop.f32.mrb[0].mxu0
      %v832 = vadd.f32 0.0, %v831
      %v833 = vpop.f32.mrb[0].mxu0
      %834 = vmatprep.mubr.f32.mxu0 0.0
      %835 = vmatmul.mubr.f32.gmra.mrb[0].mxu0 %v697
      %v836 = vpop.f32.mrb[0].mxu0
      %v837 = vadd.f32 0.0, %v836
      %v838 = vpop.f32.mrb[0].mxu0
      %839 = vmatprep.mubr.f32.mxu0 0.0
      %840 = vmatmul.mubr.f32.gmra.mrb[0].mxu0 %v700
      %v841 = vpop.f32.mrb[0].mxu0
      %v842 = vadd.f32 0.0, %v841
      %v843 = vpop.f32.mrb[0].mxu0
      %844 = vmatprep.mubr.f32.mxu0 0.0
      %845 = vmatmul.mubr.f32.gmra.mrb[0].mxu0 %v703
      %v846 = vpop.f32.mrb[0].mxu0
      %v847 = vadd.f32 0.0, %v846
      %v848 = vpop.f32.mrb[0].mxu0
      %849 = vmatprep.mubr.f32.mxu0 0.0
      %850 = vmatmul.mubr.f32.gmra.mrb[0].mxu0 %v706
      %v851 = vpop.f32.mrb[0].mxu0
      %v852 = vadd.f32 0.0, %v851
      %v853 = vpop.f32.mrb[0].mxu0
      %854 = vmatprep.mubr.f32.mxu0 0.0
      %855 = vmatmul.mubr.f32.gmra.mrb[0].mxu0 %v709
      %v856 = vpop.f32.mrb[0].mxu0
      %v857 = vadd.f32 0.0, %v856
      %v858 = vpop.f32.mrb[0].mxu0
      %859 = vdwg.mxu0
      %v860 = vmul.f32 %v782, 0.017857144
      %v861 = vmul.f32 %v787, 0.017857144
      %v862 = vmul.f32 %v792, 0.017857144
      %v863 = vmul.f32 %v797, 0.017857144
      %v864 = vmul.f32 %v802, 0.017857144
      %v865 = vmul.f32 %v807, 0.017857144
      %v866 = vmul.f32 %v812, 0.017857144
      %v867 = vmul.f32 %v817, 0.017857144
      %v868 = vmul.f32 %v822, 0.017857144
      %v869 = vmul.f32 %v827, 0.017857144
      %v870 = vmul.f32 %v832, 0.017857144
      %v871 = vmul.f32 %v837, 0.017857144
      %v872 = vmul.f32 %v842, 0.017857144
      %v873 = vmul.f32 %v847, 0.017857144
      %v874 = vmul.f32 %v852, 0.017857144
      %v875 = vmul.f32 %v857, 0.017857144
      %876 = vxpose.xlu0.b32.start [1/16] %v629, 128
      %877 = vxpose.xlu0.b32.cont [2/16] 0.0, 128
      %878 = vxpose.xlu0.b32.cont [3/16] 0.0, 128
      %879 = vxpose.xlu0.b32.cont [4/16] 0.0, 128
      %880 = vxpose.xlu0.b32.cont [5/16] 0.0, 128
      %881 = vxpose.xlu0.b32.cont [6/16] 0.0, 128
      %882 = vxpose.xlu0.b32.cont [7/16] 0.0, 128
      %883 = vxpose.xlu0.b32.cont [8/16] 0.0, 128
      %884 = vxpose.xlu0.b32.cont [9/16] 0.0, 128
      %885 = vxpose.xlu0.b32.cont [10/16] 0.0, 128
      %886 = vxpose.xlu0.b32.cont [11/16] 0.0, 128
      %887 = vxpose.xlu0.b32.cont [12/16] 0.0, 128
      %888 = vxpose.xlu0.b32.cont [13/16] 0.0, 128
      %889 = vxpose.xlu0.b32.cont [14/16] 0.0, 128
      %890 = vxpose.xlu0.b32.cont [15/16] 0.0, 128
      %891 = vxpose.xlu0.b32.end [16/16] 0.0, 128
      %v892 = vpop.trf.xlu0
      %v893 = vpop.trf.xlu0
      %v894 = vpop.trf.xlu0
      %v895 = vpop.trf.xlu0
      %v896 = vpop.trf.xlu0
      %v897 = vpop.trf.xlu0
      %v898 = vpop.trf.xlu0
      %v899 = vpop.trf.xlu0
      %v900 = vpop.trf.xlu0
      %v901 = vpop.trf.xlu0
      %v902 = vpop.trf.xlu0
      %v903 = vpop.trf.xlu0
      %v904 = vpop.trf.xlu0
      %v905 = vpop.trf.xlu0
      %v906 = vpop.trf.xlu0
      %v907 = vpop.trf.xlu0
      %v909 = vsel %vm662, %v892, 0
      %v912 = vsel %vm662, %v893, 0
      %v915 = vsel %vm662, %v894, 0
      %v918 = vsel %vm662, %v895, 0
      %v921 = vsel %vm662, %v896, 0
      %v924 = vsel %vm662, %v897, 0
      %v927 = vsel %vm662, %v898, 0
      %v930 = vsel %vm662, %v899, 0
      %v933 = vsel %vm662, %v900, 0
      %v936 = vsel %vm662, %v901, 0
      %v939 = vsel %vm662, %v902, 0
      %v942 = vsel %vm662, %v903, 0
      %v945 = vsel %vm662, %v904, 0
      %v948 = vsel %vm662, %v905, 0
      %v951 = vsel %vm662, %v906, 0
      %v954 = vsel %vm662, %v907, 0
      %v957 = vsel %vm711, %v629, 0
      %959 = vmatprep.subr.mxu0 0.0
      %960 = vmatpush1.msra.mxu0 %v957
      %961 = vmatprep.subr.mxu0 0.0
      %962 = vmatpush1.msra.mxu0 0.0
      %963 = vmatprep.subr.mxu0 0.0
      %964 = vmatpush1.msra.mxu0 0.0
      %965 = vmatprep.subr.mxu0 0.0
      %966 = vmatpush1.msra.mxu0 0.0
      %967 = vmatprep.subr.mxu0 0.0
      %968 = vmatpush1.msra.mxu0 0.0
      %969 = vmatprep.subr.mxu0 0.0
      %970 = vmatpush1.msra.mxu0 0.0
      %971 = vmatprep.subr.mxu0 0.0
      %972 = vmatpush1.msra.mxu0 0.0
      %973 = vmatprep.subr.mxu0 0.0
      %974 = vmatpush1.msra.mxu0 0.0
      %975 = vmatprep.subr.mxu0 0.0
      %976 = vmatpush1.msra.mxu0 0.0
      %977 = vmatprep.subr.mxu0 0.0
      %978 = vmatpush1.msra.mxu0 0.0
      %979 = vmatprep.subr.mxu0 0.0
      %980 = vmatpush1.msra.mxu0 0.0
      %981 = vmatprep.subr.mxu0 0.0
      %982 = vmatpush1.msra.mxu0 0.0
      %983 = vmatprep.subr.mxu0 0.0
      %984 = vmatpush1.msra.mxu0 0.0
      %985 = vmatprep.subr.mxu0 0.0
      %986 = vmatpush1.msra.mxu0 0.0
      %987 = vmatprep.subr.mxu0 0.0
      %988 = vmatpush1.msra.mxu0 0.0
      %989 = vmatprep.subr.mxu0 0.0
      %990 = vmatpush1.msra.mxu0 0.0
      %991 = vmatprep.subr.mxu0 0.0
      %992 = vmatpush1.msra.mxu0 0.0
      %993 = vmatprep.subr.mxu0 0.0
      %994 = vmatpush1.msra.mxu0 0.0
      %995 = vmatprep.subr.mxu0 0.0
      %996 = vmatpush1.msra.mxu0 0.0
      %997 = vmatprep.subr.mxu0 0.0
      %998 = vmatpush1.msra.mxu0 0.0
      %999 = vmatprep.subr.mxu0 0.0
      %1000 = vmatpush1.msra.mxu0 0.0
      %1001 = vmatprep.subr.mxu0 0.0
      %1002 = vmatpush1.msra.mxu0 0.0
      %1003 = vmatprep.subr.mxu0 0.0
      %1004 = vmatpush1.msra.mxu0 0.0
      %1005 = vmatprep.subr.mxu0 0.0
      %1006 = vmatpush1.msra.mxu0 0.0
      %1007 = vmatprep.subr.mxu0 0.0
      %1008 = vmatpush1.msra.mxu0 0.0
      %1009 = vmatprep.subr.mxu0 0.0
      %1010 = vmatpush1.msra.mxu0 0.0
      %1011 = vmatprep.subr.mxu0 0.0
      %1012 = vmatpush1.msra.mxu0 0.0
      %1013 = vmatprep.subr.mxu0 0.0
      %1014 = vmatpush1.msra.mxu0 0.0
      %1015 = vmatprep.subr.mxu0 0.0
      %1016 = vmatpush1.msra.mxu0 0.0
      %1017 = vmatprep.subr.mxu0 0.0
      %1018 = vmatpush1.msra.mxu0 0.0
      %1019 = vmatprep.subr.mxu0 0.0
      %1020 = vmatpush1.msra.mxu0 0.0
      %1021 = vmatprep.subr.mxu0 0.0
      %1022 = vmatpush1.msra.mxu0 0.0
      %1023 = vmatprep.mubr.f32.mxu0 0.0
      %1024 = vmatmul.mubr.f32.gmra.mrb[0].mxu0 %v909
      %v1025 = vpop.f32.mrb[0].mxu0
      %v1026 = vadd.f32 0.0, %v1025
      %v1027 = vpop.f32.mrb[0].mxu0
      %1028 = vmatprep.mubr.f32.mxu0 0.0
      %1029 = vmatmul.mubr.f32.gmra.mrb[0].mxu0 %v912
      %v1030 = vpop.f32.mrb[0].mxu0
      %v1031 = vadd.f32 0.0, %v1030
      %v1032 = vpop.f32.mrb[0].mxu0
      %1033 = vmatprep.mubr.f32.mxu0 0.0
      %1034 = vmatmul.mubr.f32.gmra.mrb[0].mxu0 %v915
      %v1035 = vpop.f32.mrb[0].mxu0
      %v1036 = vadd.f32 0.0, %v1035
      %v1037 = vpop.f32.mrb[0].mxu0
      %1038 = vmatprep.mubr.f32.mxu0 0.0
      %1039 = vmatmul.mubr.f32.gmra.mrb[0].mxu0 %v918
      %v1040 = vpop.f32.mrb[0].mxu0
      %v1041 = vadd.f32 0.0, %v1040
      %v1042 = vpop.f32.mrb[0].mxu0
      %1043 = vmatprep.mubr.f32.mxu0 0.0
      %1044 = vmatmul.mubr.f32.gmra.mrb[0].mxu0 %v921
      %v1045 = vpop.f32.mrb[0].mxu0
      %v1046 = vadd.f32 0.0, %v1045
      %v1047 = vpop.f32.mrb[0].mxu0
      %1048 = vmatprep.mubr.f32.mxu0 0.0
      %1049 = vmatmul.mubr.f32.gmra.mrb[0].mxu0 %v924
      %v1050 = vpop.f32.mrb[0].mxu0
      %v1051 = vadd.f32 0.0, %v1050
      %v1052 = vpop.f32.mrb[0].mxu0
      %1053 = vmatprep.mubr.f32.mxu0 0.0
      %1054 = vmatmul.mubr.f32.gmra.mrb[0].mxu0 %v927
      %v1055 = vpop.f32.mrb[0].mxu0
      %v1056 = vadd.f32 0.0, %v1055
      %v1057 = vpop.f32.mrb[0].mxu0
      %1058 = vmatprep.mubr.f32.mxu0 0.0
      %1059 = vmatmul.mubr.f32.gmra.mrb[0].mxu0 %v930
      %v1060 = vpop.f32.mrb[0].mxu0
      %v1061 = vadd.f32 0.0, %v1060
      %v1062 = vpop.f32.mrb[0].mxu0
      %1063 = vmatprep.mubr.f32.mxu0 0.0
      %1064 = vmatmul.mubr.f32.gmra.mrb[0].mxu0 %v933
      %v1065 = vpop.f32.mrb[0].mxu0
      %v1066 = vadd.f32 0.0, %v1065
      %v1067 = vpop.f32.mrb[0].mxu0
      %1068 = vmatprep.mubr.f32.mxu0 0.0
      %1069 = vmatmul.mubr.f32.gmra.mrb[0].mxu0 %v936
      %v1070 = vpop.f32.mrb[0].mxu0
      %v1071 = vadd.f32 0.0, %v1070
      %v1072 = vpop.f32.mrb[0].mxu0
      %1073 = vmatprep.mubr.f32.mxu0 0.0
      %1074 = vmatmul.mubr.f32.gmra.mrb[0].mxu0 %v939
      %v1075 = vpop.f32.mrb[0].mxu0
      %v1076 = vadd.f32 0.0, %v1075
      %v1077 = vpop.f32.mrb[0].mxu0
      %1078 = vmatprep.mubr.f32.mxu0 0.0
      %1079 = vmatmul.mubr.f32.gmra.mrb[0].mxu0 %v942
      %v1080 = vpop.f32.mrb[0].mxu0
      %v1081 = vadd.f32 0.0, %v1080
      %v1082 = vpop.f32.mrb[0].mxu0
      %1083 = vmatprep.mubr.f32.mxu0 0.0
      %1084 = vmatmul.mubr.f32.gmra.mrb[0].mxu0 %v945
      %v1085 = vpop.f32.mrb[0].mxu0
      %v1086 = vadd.f32 0.0, %v1085
      %v1087 = vpop.f32.mrb[0].mxu0
      %1088 = vmatprep.mubr.f32.mxu0 0.0
      %1089 = vmatmul.mubr.f32.gmra.mrb[0].mxu0 %v948
      %v1090 = vpop.f32.mrb[0].mxu0
      %v1091 = vadd.f32 0.0, %v1090
      %v1092 = vpop.f32.mrb[0].mxu0
      %1093 = vmatprep.mubr.f32.mxu0 0.0
      %1094 = vmatmul.mubr.f32.gmra.mrb[0].mxu0 %v951
      %v1095 = vpop.f32.mrb[0].mxu0
      %v1096 = vadd.f32 0.0, %v1095
      %v1097 = vpop.f32.mrb[0].mxu0
      %1098 = vmatprep.mubr.f32.mxu0 0.0
      %1099 = vmatmul.mubr.f32.gmra.mrb[0].mxu0 %v954
      %v1100 = vpop.f32.mrb[0].mxu0
      %v1101 = vadd.f32 0.0, %v1100
      %v1102 = vpop.f32.mrb[0].mxu0
      %1103 = vdwg.mxu0
      %v1104 = vmul.f32 %v1026, 0.017857144
      %v1105 = vmul.f32 %v1031, 0.017857144
      %v1106 = vmul.f32 %v1036, 0.017857144
      %v1107 = vmul.f32 %v1041, 0.017857144
      %v1108 = vmul.f32 %v1046, 0.017857144
      %v1109 = vmul.f32 %v1051, 0.017857144
      %v1110 = vmul.f32 %v1056, 0.017857144
      %v1111 = vmul.f32 %v1061, 0.017857144
      %v1112 = vmul.f32 %v1066, 0.017857144
      %v1113 = vmul.f32 %v1071, 0.017857144
      %v1114 = vmul.f32 %v1076, 0.017857144
      %v1115 = vmul.f32 %v1081, 0.017857144
      %v1116 = vmul.f32 %v1086, 0.017857144
      %v1117 = vmul.f32 %v1091, 0.017857144
      %v1118 = vmul.f32 %v1096, 0.017857144
      %v1119 = vmul.f32 %v1101, 0.017857144
      %v1120 = vld [vmem:[#allocation2] sm:$0xff]
      %v1121 = vld [vmem:[#allocation2 + $0x8] sm:$0xff]
      %v1122 = vld [vmem:[#allocation2 + $0x10] sm:$0xff]
      %v1123 = vld [vmem:[#allocation2 + $0x18] sm:$0xff]
      %v1124 = vld [vmem:[#allocation2 + $0x20] sm:$0xff]
      %v1125 = vld [vmem:[#allocation2 + $0x28] sm:$0xff]
      %v1126 = vld [vmem:[#allocation2 + $0x30] sm:$0xff]
      %v1127 = vld [vmem:[#allocation2 + $0x38] sm:$0xff]
      %v1128 = vld [vmem:[#allocation2 + $0x40] sm:$0xff]
      %v1129 = vld [vmem:[#allocation2 + $0x48] sm:$0xff]
      %v1130 = vld [vmem:[#allocation2 + $0x50] sm:$0xff]
      %v1131 = vld [vmem:[#allocation2 + $0x58] sm:$0xff]
      %v1132 = vld [vmem:[#allocation2 + $0x60] sm:$0xff]
      %v1133 = vld [vmem:[#allocation2 + $0x68] sm:$0xff]
      %v1134 = vld [vmem:[#allocation2 + $0x70] sm:$0xff]
      %v1135 = vld [vmem:[#allocation2 + $0x78] sm:$0xff]
      %v1136 = vsub.f32 %v1120, %v860
      %v1137 = vsub.f32 %v1121, %v861
      %v1138 = vsub.f32 %v1122, %v862
      %v1139 = vsub.f32 %v1123, %v863
      %v1140 = vsub.f32 %v1124, %v864
      %v1141 = vsub.f32 %v1125, %v865
      %v1142 = vsub.f32 %v1126, %v866
      %v1143 = vsub.f32 %v1127, %v867
      %v1144 = vsub.f32 %v1128, %v868
      %v1145 = vsub.f32 %v1129, %v869
      %v1146 = vsub.f32 %v1130, %v870
      %v1147 = vsub.f32 %v1131, %v871
      %v1148 = vsub.f32 %v1132, %v872
      %v1149 = vsub.f32 %v1133, %v873
      %v1150 = vsub.f32 %v1134, %v874
      %v1151 = vsub.f32 %v1135, %v875
      %v1152 = vadd.f32 %v1136, %v1104
      %v1153 = vadd.f32 %v1137, %v1105
      %v1154 = vadd.f32 %v1138, %v1106
      %v1155 = vadd.f32 %v1139, %v1107
      %v1156 = vadd.f32 %v1140, %v1108
      %v1157 = vadd.f32 %v1141, %v1109
      %v1158 = vadd.f32 %v1142, %v1110
      %v1159 = vadd.f32 %v1143, %v1111
      %v1160 = vadd.f32 %v1144, %v1112
      %v1161 = vadd.f32 %v1145, %v1113
      %v1162 = vadd.f32 %v1146, %v1114
      %v1163 = vadd.f32 %v1147, %v1115
      %v1164 = vadd.f32 %v1148, %v1116
      %v1165 = vadd.f32 %v1149, %v1117
      %v1166 = vadd.f32 %v1150, %v1118
      %v1167 = vadd.f32 %v1151, %v1119
      %v1168 = vmul.f32 %v1152, %v1152
      %v1169 = vmul.f32 %v1153, %v1153
      %v1170 = vmul.f32 %v1154, %v1154
      %v1171 = vmul.f32 %v1155, %v1155
      %v1172 = vmul.f32 %v1156, %v1156
      %v1173 = vmul.f32 %v1157, %v1157
      %v1174 = vmul.f32 %v1158, %v1158
      %v1175 = vmul.f32 %v1159, %v1159
      %v1176 = vmul.f32 %v1160, %v1160
      %v1177 = vmul.f32 %v1161, %v1161
      %v1178 = vmul.f32 %v1162, %v1162
      %v1179 = vmul.f32 %v1163, %v1163
      %v1180 = vmul.f32 %v1164, %v1164
      %v1181 = vmul.f32 %v1165, %v1165
      %v1182 = vmul.f32 %v1166, %v1166
      %v1183 = vmul.f32 %v1167, %v1167
      %v1184 = vadd.f32 %v1168, %v1169
      %v1185 = vadd.f32 %v1184, %v1170
      %v1186 = vadd.f32 %v1185, %v1171
      %v1187 = vadd.f32 %v1186, %v1172
      %v1188 = vadd.f32 %v1187, %v1173
      %v1189 = vadd.f32 %v1188, %v1174
      %v1190 = vadd.f32 %v1189, %v1175
      %v1191 = vadd.f32 %v1190, %v1176
      %v1192 = vadd.f32 %v1191, %v1177
      %v1193 = vadd.f32 %v1192, %v1178
      %v1194 = vadd.f32 %v1193, %v1179
      %v1195 = vadd.f32 %v1194, %v1180
      %v1196 = vadd.f32 %v1195, %v1181
      %v1197 = vadd.f32 %v1196, %v1182
      %v1198 = vadd.f32 %v1197, %v1183
      %1199 = vadd.xlane.f32.xlu0 %v1198
      %v1200 = vpop.xlane.xlu0 %1199
      %v1201 = vrot.slane %v1200, 4
      %v1202 = vadd.f32 %v1200, %v1201
      %v1203 = vrot.slane %v1202, 2
      %v1204 = vadd.f32 %v1202, %v1203
      %v1205 = vrot.slane %v1204, 1
      %v1206 = vadd.f32 %v1204, %v1205
      %s1207 = vtos %v1206
      %v1208 = vstv %s1207
      %v1209 = vmul.f32 %v1208, 0.00024414063
      %vm1210 = vcmask 0
      %1211 = vst.msk [vmem:[#allocation10] sm:$0x1] %vm1210, %v1209
    $region25: #{tpu_custom_call.1} parent=1 // pred_fallthru
      _
    // Predicated region
    $region26: #{tpu_custom_call.1} parent=1 // pred_check
      _
    $region27: #{tpu_custom_call.1} parent=1 // pred_check_branch
      %1213 = sbr.rel (0) target = $region29
    $region28: #{tpu_custom_call.1} parent=1 // pred_region
      %s1215 = ssub.s32 16, 16
      %1216 = vsyncadd [#allocation7], %s1215
      %s1218 = sshll.u32 [#allocation10], 4
      %s1219 = int_to_ptr.vmem [resolvable:$true] %s1218
      %1221 = dma.vmem_to_hbm [thread:$0]  %s1219, 16, %s2, [#allocation7]
    $region29: #{tpu_custom_call.1} parent=1 // pred_fallthru
      _
    // Predicated region
    $region30: #{tpu_custom_call.1} parent=1 // pred_check
      _
    $region31: #{tpu_custom_call.1} parent=1 // pred_check_branch
      %1223 = sbr.rel (0) target = $region33
    $region32: #{tpu_custom_call.1} parent=1 // pred_region
      %1224 = dma.done [#allocation7], 16
    $region33: #{tpu_custom_call.1} parent=1 // pred_fallthru
      _
    %1225 = vsyncpa [#allocation6], 1
    %1226 = vsyncpa [#allocation9], 1
    %1227 = vsyncpa [#allocation7], 1

</llo_original>
